<compile_context>
chip_gen: v6e
topology: v6e:2x2x1
jax: 0.10.0
libtpu: 0.0.40
codegen_flags: <defaults>
</compile_context>

<pallas_src>
import functools

import jax
import jax.numpy as jnp
from jax.experimental import pallas as pl
from jax.experimental.pallas import tpu as pltpu

_BIG = 1e15          # same masking constant as the PyTorch module
_NORM_EPS = 1e-12

# Conservative resident-slab budget so the same heuristic is safe on v7x
# (64 MiB VMEM per TensorCore).  TODO(synk): raise ~2.5x on v5e/v6e (128 MiB).
_RESIDENT_VMEM_BUDGET = 40 * 1024 * 1024
_VMEM_LIMIT_BYTES = 56 * 1024 * 1024


def _round_up(x, m):
    return (x + m - 1) // m * m


def _choose_tiles(n, d):
    """Pick (tile_i, tile_j, n_pad).  tile_i = lane/output tile, tile_j = reduction tile."""
    n8 = _round_up(n, 8)
    if n8 <= 512:
        tile_i = n8            # single full-width lane tile (equals the padded dim)
    else:
        tile_i = 256           # fills the 256-wide MXU on v6e/v7x, multiple of 128
    n_pad = _round_up(n, tile_i)
    # Keep the whole bf16 j-slab resident in VMEM when slab + streamed i-operand
    # + f32 elementwise temporaries fit the budget; else fall back to tiled j.
    resident_bytes = (2 * n_pad * d * 2          # j slab (assume double-buffered)
                      + 2 * tile_i * d * 2       # streamed i operand
                      + 6 * n_pad * tile_i * 4)  # (tile_j, tile_i) f32 temporaries
    tile_j = n_pad if resident_bytes <= _RESIDENT_VMEM_BUDGET else tile_i
    return tile_i, tile_j, n_pad


def _pairwise_kernel(xs_ref, xk_ref, t_lane_ref, t_sub_ref,
                     loss_ref, acc_ref,
                     loss_acc, minp_acc, maxn_acc,
                     *, bias, n_valid, tile_i, tile_j):
    """Grid = (i row-tiles, j column-tiles); j is the reduction axis (innermost)."""
    i = pl.program_id(0)
    j = pl.program_id(1)

    @pl.when(j == 0)
    def _init():
        loss_acc[...] = jnp.zeros_like(loss_acc)
        minp_acc[...] = jnp.full_like(minp_acc, _BIG)
        maxn_acc[...] = jnp.full_like(maxn_acc, -_BIG)

    # matcher(features): pairwise scores on the MXU.  Operands are pre-normalized
    # bf16 from the wrapper; the matcher scale is folded into the lane operand,
    # so only the bias add remains.  RHS consumed with its last dim contracted
    # (no XLU transpose); result is (tile_j, tile_i) = transposed score block.
    score_t = jax.lax.dot_general(
        xk_ref[...], xs_ref[...],
        dimension_numbers=(((1,), (1,)), ((), ())),
        preferred_element_type=jnp.float32) + bias

    # Pair labels built in-kernel from the raw targets: (tile_j,1) == (1,tile_i).
    same = t_sub_ref[...] == t_lane_ref[...]
    y = same.astype(jnp.float32)

    # binary_cross_entropy_with_logits (reduction='none').
    bce = (jnp.maximum(score_t, 0.0) - score_t * y
           + jnp.log1p(jnp.exp(-jnp.abs(score_t))))

    # Fast path: this j tile has no padded rows and cannot contain the diagonal
    # -> skip iota / validity / diag mask construction entirely.
    row0_i = i * tile_i
    row0_j = j * tile_j
    full_tile = row0_j + tile_j <= n_valid
    has_diag = jnp.logical_and(row0_j < row0_i + tile_i, row0_i < row0_j + tile_j)
    fast = jnp.logical_and(full_tile, jnp.logical_not(has_diag))

    @pl.when(fast)
    def _update_fast():
        loss_acc[...] += jnp.sum(bce, axis=0, keepdims=True)
        minp_acc[...] = jnp.minimum(
            minp_acc[...],
            jnp.min(jnp.where(same, score_t, _BIG), axis=0, keepdims=True))
        maxn_acc[...] = jnp.maximum(
            maxn_acc[...],
            jnp.max(jnp.where(same, -_BIG, score_t), axis=0, keepdims=True))

    @pl.when(jnp.logical_not(fast))
    def _update_masked():
        gj = row0_j + jax.lax.broadcasted_iota(jnp.int32, score_t.shape, 0)
        gi = row0_i + jax.lax.broadcasted_iota(jnp.int32, score_t.shape, 1)
        valid = gj < n_valid                      # mask padded j rows
        pos = jnp.logical_and(jnp.logical_and(same, gj != gi), valid)
        neg = jnp.logical_and(jnp.logical_not(same), valid)
        # Diagonal terms ARE included in the BCE sum (matches the PyTorch module).
        loss_acc[...] += jnp.sum(jnp.where(valid, bce, 0.0), axis=0, keepdims=True)
        minp_acc[...] = jnp.minimum(
            minp_acc[...],
            jnp.min(jnp.where(pos, score_t, _BIG), axis=0, keepdims=True))
        maxn_acc[...] = jnp.maximum(
            maxn_acc[...],
            jnp.max(jnp.where(neg, score_t, -_BIG), axis=0, keepdims=True))

    @pl.when(j == pl.num_programs(1) - 1)
    def _finalize():
        loss_ref[...] = loss_acc[...]                                   # lane-dense
        acc_ref[...] = (minp_acc[...] > maxn_acc[...]).astype(jnp.float32)


def pairwise_matching_loss(features, target, scale=10.0, bias=-5.0,
                           mxu_dtype=jnp.bfloat16, tile_override=None):
    """features: [N, C, H, W] float; target: [N] int.  Returns (loss [N], acc [N])."""
    n = features.shape[0]
    d = int(features.size) // n

    # ---- matcher.make_kernel (+ scale fold + bf16 cast), once, in XLA ----
    x = features.reshape(n, d).astype(jnp.float32)
    xn = x * jax.lax.rsqrt(jnp.sum(x * x, axis=-1, keepdims=True) + _NORM_EPS)

    if tile_override is None:
        tile_i, tile_j, n_pad = _choose_tiles(n, d)
    else:
        tile_i, tile_j = tile_override
        n_pad = _round_up(n, tile_i)
        assert n_pad % tile_j == 0
    pad = n_pad - n

    # Lane operand carries the matcher scale; sublane (reduction) operand is the
    # plain normalized kernel.  Both stored/DMA'd as bf16 (half the f32 traffic).
    xs = jnp.pad((xn * scale).astype(mxu_dtype), ((0, pad), (0, 0)))
    xk = jnp.pad(xn.astype(mxu_dtype), ((0, pad), (0, 0)))
    t_p = jnp.pad(target.astype(jnp.int32), (0, pad), constant_values=-1)
    t_lane = t_p.reshape(1, n_pad)     # targets for the lane (output-row) axis
    t_sub = t_p.reshape(n_pad, 1)      # targets for the sublane (reduced) axis

    kernel = functools.partial(
        _pairwise_kernel, bias=float(bias), n_valid=n,
        tile_i=tile_i, tile_j=tile_j)

    # TODO(synk): for very large D add a K (feature) grid axis so the operand
    # tiles stay inside the VMEM limit; D = C*H*W fits trivially here.
    loss_p, acc_p = pl.pallas_call(
        kernel,
        out_shape=(jax.ShapeDtypeStruct((1, n_pad), jnp.float32),
                   jax.ShapeDtypeStruct((1, n_pad), jnp.float32)),
        grid_spec=pltpu.PrefetchScalarGridSpec(
            num_scalar_prefetch=0,
            grid=(n_pad // tile_i, n_pad // tile_j),             # (i rows, j reduction)
            in_specs=[
                pl.BlockSpec((tile_i, d), lambda i, j: (i, 0)),  # scaled rows -> lanes
                pl.BlockSpec((tile_j, d), lambda i, j: (j, 0)),  # rows -> sublanes
                pl.BlockSpec((1, tile_i), lambda i, j: (0, i)),  # targets (lane axis)
                pl.BlockSpec((tile_j, 1), lambda i, j: (j, 0)),  # targets (sublane axis)
            ],
            out_specs=(
                pl.BlockSpec((1, tile_i), lambda i, j: (0, i)),  # loss, lane-dense
                pl.BlockSpec((1, tile_i), lambda i, j: (0, i)),  # acc, lane-dense
            ),
            scratch_shapes=[pltpu.VMEM((1, tile_i), jnp.float32)] * 3,
        ),
        compiler_params=pltpu.CompilerParams(
            dimension_semantics=("parallel", "arbitrary"),       # i across TCs, j reduces
            vmem_limit_bytes=_VMEM_LIMIT_BYTES),
    )(xs, xk, t_lane, t_sub)

    return loss_p[0, :n], acc_p[0, :n]


def _reference(features, target, scale=10.0, bias=-5.0, mxu_dtype=jnp.bfloat16):
    """Pure-JAX reference of the same forward pass (same bf16 operand scheme)."""
    n = features.shape[0]
    x = features.reshape(n, -1).astype(jnp.float32)
    xn = x * jax.lax.rsqrt(jnp.sum(x * x, axis=-1, keepdims=True) + _NORM_EPS)
    xs = (xn * scale).astype(mxu_dtype)
    xk = xn.astype(mxu_dtype)
    score = jnp.dot(xs, xk.T, preferred_element_type=jnp.float32) + bias
    y = (target[:, None] == target[None, :]).astype(jnp.float32)
    bce = jnp.maximum(score, 0.0) - score * y + jnp.log1p(jnp.exp(-jnp.abs(score)))
    loss = bce.sum(-1)
    eye = jnp.eye(n, dtype=jnp.float32)
    min_pos = jnp.min(score * y + (1.0 - y + eye) * _BIG, axis=1)
    max_neg = jnp.max(score * (1.0 - y) - y * _BIG, axis=1)
    acc = (min_pos > max_neg).astype(jnp.float32)
    return loss, acc


if __name__ == "__main__":
    k1f, k1t, k2f, k2t = jax.random.split(jax.random.PRNGKey(0), 4)

    # Case 1: tiny batch, single tile (typical call shape of the loss).
    N, C, H, W = 8, 4, 16, 16                       # D = C*H*W = 1024
    features = jax.random.normal(k1f, (N, C, H, W), dtype=jnp.float32)
    target = jax.random.randint(k1t, (N,), 0, 4, dtype=jnp.int32)
    loss, acc = pairwise_matching_loss(features, target)
    jax.block_until_ready((loss, acc))
    loss_r, acc_r = _reference(features, target)
    assert jnp.allclose(loss, loss_r, rtol=2e-3, atol=2e-2), (loss, loss_r)
    assert jnp.array_equal(acc, acc_r), (acc, acc_r)

    # Case 2: padded, resident-slab path (N padded to 136, grid (1, 1)).
    N2 = 130
    features2 = jax.random.normal(k2f, (N2, C, H, W), dtype=jnp.float32)
    target2 = jax.random.randint(k2t, (N2,), 0, 4, dtype=jnp.int32)
    loss2, acc2 = pairwise_matching_loss(features2, target2)
    jax.block_until_ready((loss2, acc2))
    loss2_r, acc2_r = _reference(features2, target2)
    assert jnp.allclose(loss2, loss2_r, rtol=2e-3, atol=2e-2), (loss2, loss2_r)
    assert jnp.array_equal(acc2, acc2_r), (acc2, acc2_r)

    # Case 3: force the multi-tile path (grid (2, 2)) to exercise the masked /
    # fast pl.when branches and cross-tile accumulation.
    loss3, acc3 = pairwise_matching_loss(features2, target2, tile_override=(128, 128))
    jax.block_until_ready((loss3, acc3))
    assert jnp.allclose(loss3, loss2_r, rtol=2e-3, atol=2e-2), (loss3, loss2_r)
    assert jnp.array_equal(acc3, acc2_r), (acc3, acc2_r)

    print("KERNEL_OK")
</pallas_src>

<mosaic_0001>
module attributes {stable_mosaic.version = 11 : i64} {
  func.func @_pairwise_kernel(%arg0: i32, %arg1: i32, %arg2: memref<8x1024xbf16, #tpu.memory_space<vmem>>, %arg3: memref<8x1024xbf16, #tpu.memory_space<vmem>>, %arg4: memref<1x8xi32, #tpu.memory_space<vmem>>, %arg5: memref<8x1xi32, #tpu.memory_space<vmem>>, %arg6: memref<1x8xf32, #tpu.memory_space<vmem>>, %arg7: memref<1x8xf32, #tpu.memory_space<vmem>>, %arg8: memref<1x8xf32, #tpu.memory_space<vmem>>, %arg9: memref<1x8xf32, #tpu.memory_space<vmem>>, %arg10: memref<1x8xf32, #tpu.memory_space<vmem>>) attributes {dimension_semantics = [#tpu.dimension_semantics<parallel>, #tpu.dimension_semantics<arbitrary>], iteration_bounds = array<i64: 1, 1>, scalar_prefetch = 0 : i64, scratch_operands = 3 : i64, tpu.core_type = #tpu.core_type<tc>, window_params = [{transform_indices = @transform_0, window_bounds = array<i64: 8, 1024>}, {transform_indices = @transform_1, window_bounds = array<i64: 8, 1024>}, {transform_indices = @transform_2, window_bounds = array<i64: 1, 8>}, {transform_indices = @transform_3, window_bounds = array<i64: 8, 1>}, {transform_indices = @transform_4, window_bounds = array<i64: 1, 8>}, {transform_indices = @transform_5, window_bounds = array<i64: 1, 8>}]} {
    %c0_i32 = arith.constant 0 : i32
    %0 = arith.cmpi eq, %arg1, %c0_i32 : i32
    %1 = arith.extui %0 : i1 to i32
    %c0_i32_0 = arith.constant 0 : i32
    %2 = arith.cmpi ne, %1, %c0_i32_0 : i32
    scf.if %2 {
      %cst_21 = arith.constant 0.000000e+00 : f32
      %44 = vector.broadcast %cst_21 : f32 to vector<1x8xf32>
      %c0_22 = arith.constant 0 : index
      %c0_23 = arith.constant 0 : index
      %45 = vector.load %arg8[%c0_22, %c0_23] : memref<1x8xf32, #tpu.memory_space<vmem>>, vector<1x8xf32>
      tpu.vector_store %arg8[%c0_22, %c0_23], %44 {strides = array<i32>} : memref<1x8xf32, #tpu.memory_space<vmem>>, vector<1x8xf32>,
      %cst_24 = arith.constant 9.99999986E+14 : f32
      %46 = vector.broadcast %cst_24 : f32 to vector<1x8xf32>
      %c0_25 = arith.constant 0 : index
      %c0_26 = arith.constant 0 : index
      %47 = vector.load %arg9[%c0_25, %c0_26] : memref<1x8xf32, #tpu.memory_space<vmem>>, vector<1x8xf32>
      tpu.vector_store %arg9[%c0_25, %c0_26], %46 {strides = array<i32>} : memref<1x8xf32, #tpu.memory_space<vmem>>, vector<1x8xf32>,
      %cst_27 = arith.constant -9.99999986E+14 : f32
      %48 = vector.broadcast %cst_27 : f32 to vector<1x8xf32>
      %c0_28 = arith.constant 0 : index
      %c0_29 = arith.constant 0 : index
      %49 = vector.load %arg10[%c0_28, %c0_29] : memref<1x8xf32, #tpu.memory_space<vmem>>, vector<1x8xf32>
      tpu.vector_store %arg10[%c0_28, %c0_29], %48 {strides = array<i32>} : memref<1x8xf32, #tpu.memory_space<vmem>>, vector<1x8xf32>,
    } else {
    }
    %c0 = arith.constant 0 : index
    %c0_1 = arith.constant 0 : index
    %3 = vector.load %arg3[%c0, %c0_1] : memref<8x1024xbf16, #tpu.memory_space<vmem>>, vector<8x1024xbf16>
    %c0_2 = arith.constant 0 : index
    %c0_3 = arith.constant 0 : index
    %4 = vector.load %arg2[%c0_2, %c0_3] : memref<8x1024xbf16, #tpu.memory_space<vmem>>, vector<8x1024xbf16>
    %cst = arith.constant dense<0.000000e+00> : vector<8x8xf32>
    %5 = tpu.matmul %3, %4, %cst {dimension_numbers = #tpu.dot_dimension_numbers<[1], [1], [0], [0], [0, 0, 1, 0], [], []>} : vector<8x1024xbf16>, vector<8x1024xbf16>, vector<8x8xf32> -> vector<8x8xf32>
    %cst_4 = arith.constant -5.000000e+00 : f32
    %6 = vector.broadcast %cst_4 : f32 to vector<8x8xf32>
    %7 = arith.addf %5, %6 : vector<8x8xf32>
    %c0_5 = arith.constant 0 : index
    %c0_6 = arith.constant 0 : index
    %8 = vector.load %arg5[%c0_5, %c0_6] : memref<8x1xi32, #tpu.memory_space<vmem>>, vector<8x1xi32>
    %c0_7 = arith.constant 0 : index
    %c0_8 = arith.constant 0 : index
    %9 = vector.load %arg4[%c0_7, %c0_8] : memref<1x8xi32, #tpu.memory_space<vmem>>, vector<1x8xi32>
    %10 = vector.broadcast %8 : vector<8x1xi32> to vector<8x8xi32>
    %11 = vector.broadcast %9 : vector<1x8xi32> to vector<8x8xi32>
    %12 = arith.cmpi eq, %10, %11 : vector<8x8xi32>
    %13 = arith.extui %12 : vector<8x8xi1> to vector<8x8xi32>
    %14 = arith.sitofp %13 : vector<8x8xi32> to vector<8x8xf32>
    %cst_9 = arith.constant 0.000000e+00 : f32
    %15 = vector.broadcast %cst_9 : f32 to vector<8x8xf32>
    %16 = arith.maximumf %7, %15 : vector<8x8xf32>
    %17 = arith.mulf %7, %14 : vector<8x8xf32>
    %18 = arith.subf %16, %17 : vector<8x8xf32>
    %19 = math.absf %7 : vector<8x8xf32>
    %cst_10 = arith.constant 0.000000e+00 : f32
    %20 = vector.broadcast %cst_10 : f32 to vector<8x8xf32>
    %21 = arith.subf %20, %19 : vector<8x8xf32>
    %22 = math.exp %21 : vector<8x8xf32>
    %23 = math.log1p %22 : vector<8x8xf32>
    %24 = arith.addf %18, %23 : vector<8x8xf32>
    %c8_i32 = arith.constant 8 : i32
    %25 = arith.muli %arg0, %c8_i32 : i32
    %c8_i32_11 = arith.constant 8 : i32
    %26 = arith.muli %arg1, %c8_i32_11 : i32
    %c8_i32_12 = arith.constant 8 : i32
    %27 = arith.addi %26, %c8_i32_12 : i32
    %c8_i32_13 = arith.constant 8 : i32
    %28 = arith.cmpi sle, %27, %c8_i32_13 : i32
    %c8_i32_14 = arith.constant 8 : i32
    %29 = arith.addi %25, %c8_i32_14 : i32
    %30 = arith.cmpi slt, %26, %29 : i32
    %c8_i32_15 = arith.constant 8 : i32
    %31 = arith.addi %26, %c8_i32_15 : i32
    %32 = arith.cmpi slt, %25, %31 : i32
    %33 = arith.andi %30, %32 : i1
    %true = arith.constant true
    %34 = arith.xori %33, %true : i1
    %35 = arith.andi %28, %34 : i1
    %36 = arith.extui %35 : i1 to i32
    %c0_i32_16 = arith.constant 0 : i32
    %37 = arith.cmpi ne, %36, %c0_i32_16 : i32
    scf.if %37 {
      %c0_21 = arith.constant 0 : index
      %c0_22 = arith.constant 0 : index
      %44 = vector.load %arg8[%c0_21, %c0_22] : memref<1x8xf32, #tpu.memory_space<vmem>>, vector<1x8xf32>
      %cst_23 = arith.constant dense<0.000000e+00> : vector<8xf32>
      %45 = vector.multi_reduction <add>, %24, %cst_23 [0] : vector<8x8xf32> to vector<8xf32>
      %46 = vector.shape_cast %45 : vector<8xf32> to vector<1x8xf32>
      %47 = arith.addf %44, %46 : vector<1x8xf32>
      %c0_24 = arith.constant 0 : index
      %c0_25 = arith.constant 0 : index
      %48 = vector.load %arg8[%c0_24, %c0_25] : memref<1x8xf32, #tpu.memory_space<vmem>>, vector<1x8xf32>
      tpu.vector_store %arg8[%c0_24, %c0_25], %47 {strides = array<i32>} : memref<1x8xf32, #tpu.memory_space<vmem>>, vector<1x8xf32>,
      %c0_26 = arith.constant 0 : index
      %c0_27 = arith.constant 0 : index
      %49 = vector.load %arg9[%c0_26, %c0_27] : memref<1x8xf32, #tpu.memory_space<vmem>>, vector<1x8xf32>
      %cst_28 = arith.constant 9.99999986E+14 : f32
      %50 = vector.broadcast %cst_28 : f32 to vector<8x8xf32>
      %51 = arith.select %12, %7, %50 : vector<8x8xi1>, vector<8x8xf32>
      %cst_29 = arith.constant dense<0x7F800000> : vector<8xf32>
      %52 = vector.multi_reduction <minimumf>, %51, %cst_29 [0] : vector<8x8xf32> to vector<8xf32>
      %53 = vector.shape_cast %52 : vector<8xf32> to vector<1x8xf32>
      %54 = arith.minimumf %49, %53 : vector<1x8xf32>
      %c0_30 = arith.constant 0 : index
      %c0_31 = arith.constant 0 : index
      %55 = vector.load %arg9[%c0_30, %c0_31] : memref<1x8xf32, #tpu.memory_space<vmem>>, vector<1x8xf32>
      tpu.vector_store %arg9[%c0_30, %c0_31], %54 {strides = array<i32>} : memref<1x8xf32, #tpu.memory_space<vmem>>, vector<1x8xf32>,
      %c0_32 = arith.constant 0 : index
      %c0_33 = arith.constant 0 : index
      %56 = vector.load %arg10[%c0_32, %c0_33] : memref<1x8xf32, #tpu.memory_space<vmem>>, vector<1x8xf32>
      %cst_34 = arith.constant -9.99999986E+14 : f32
      %57 = vector.broadcast %cst_34 : f32 to vector<8x8xf32>
      %58 = arith.select %12, %57, %7 : vector<8x8xi1>, vector<8x8xf32>
      %cst_35 = arith.constant dense<0xFF800000> : vector<8xf32>
      %59 = vector.multi_reduction <maximumf>, %58, %cst_35 [0] : vector<8x8xf32> to vector<8xf32>
      %60 = vector.shape_cast %59 : vector<8xf32> to vector<1x8xf32>
      %61 = arith.maximumf %56, %60 : vector<1x8xf32>
      %c0_36 = arith.constant 0 : index
      %c0_37 = arith.constant 0 : index
      %62 = vector.load %arg10[%c0_36, %c0_37] : memref<1x8xf32, #tpu.memory_space<vmem>>, vector<1x8xf32>
      tpu.vector_store %arg10[%c0_36, %c0_37], %61 {strides = array<i32>} : memref<1x8xf32, #tpu.memory_space<vmem>>, vector<1x8xf32>,
    } else {
    }
    %true_17 = arith.constant true
    %38 = arith.xori %35, %true_17 : i1
    %39 = arith.extui %38 : i1 to i32
    %c0_i32_18 = arith.constant 0 : i32
    %40 = arith.cmpi ne, %39, %c0_i32_18 : i32
    scf.if %40 {
      %44 = tpu.iota {dimensions = array<i32: 0>} : vector<8x8xi32>
      %45 = vector.broadcast %26 : i32 to vector<8x8xi32>
      %46 = arith.addi %45, %44 : vector<8x8xi32>
      %47 = tpu.iota {dimensions = array<i32: 1>} : vector<8x8xi32>
      %48 = vector.broadcast %25 : i32 to vector<8x8xi32>
      %49 = arith.addi %48, %47 : vector<8x8xi32>
      %c8_i32_21 = arith.constant 8 : i32
      %50 = vector.broadcast %c8_i32_21 : i32 to vector<8x8xi32>
      %51 = arith.cmpi slt, %46, %50 : vector<8x8xi32>
      %52 = arith.cmpi ne, %46, %49 : vector<8x8xi32>
      %53 = arith.andi %12, %52 : vector<8x8xi1>
      %54 = arith.andi %53, %51 : vector<8x8xi1>
      %cst_22 = arith.constant dense<true> : vector<8x8xi1>
      %55 = arith.xori %12, %cst_22 : vector<8x8xi1>
      %56 = arith.andi %55, %51 : vector<8x8xi1>
      %c0_23 = arith.constant 0 : index
      %c0_24 = arith.constant 0 : index
      %57 = vector.load %arg8[%c0_23, %c0_24] : memref<1x8xf32, #tpu.memory_space<vmem>>, vector<1x8xf32>
      %cst_25 = arith.constant 0.000000e+00 : f32
      %58 = vector.broadcast %cst_25 : f32 to vector<8x8xf32>
      %59 = arith.select %51, %24, %58 : vector<8x8xi1>, vector<8x8xf32>
      %cst_26 = arith.constant dense<0.000000e+00> : vector<8xf32>
      %60 = vector.multi_reduction <add>, %59, %cst_26 [0] : vector<8x8xf32> to vector<8xf32>
      %61 = vector.shape_cast %60 : vector<8xf32> to vector<1x8xf32>
      %62 = arith.addf %57, %61 : vector<1x8xf32>
      %c0_27 = arith.constant 0 : index
      %c0_28 = arith.constant 0 : index
      %63 = vector.load %arg8[%c0_27, %c0_28] : memref<1x8xf32, #tpu.memory_space<vmem>>, vector<1x8xf32>
      tpu.vector_store %arg8[%c0_27, %c0_28], %62 {strides = array<i32>} : memref<1x8xf32, #tpu.memory_space<vmem>>, vector<1x8xf32>,
      %c0_29 = arith.constant 0 : index
      %c0_30 = arith.constant 0 : index
      %64 = vector.load %arg9[%c0_29, %c0_30] : memref<1x8xf32, #tpu.memory_space<vmem>>, vector<1x8xf32>
      %cst_31 = arith.constant 9.99999986E+14 : f32
      %65 = vector.broadcast %cst_31 : f32 to vector<8x8xf32>
      %66 = arith.select %54, %7, %65 : vector<8x8xi1>, vector<8x8xf32>
      %cst_32 = arith.constant dense<0x7F800000> : vector<8xf32>
      %67 = vector.multi_reduction <minimumf>, %66, %cst_32 [0] : vector<8x8xf32> to vector<8xf32>
      %68 = vector.shape_cast %67 : vector<8xf32> to vector<1x8xf32>
      %69 = arith.minimumf %64, %68 : vector<1x8xf32>
      %c0_33 = arith.constant 0 : index
      %c0_34 = arith.constant 0 : index
      %70 = vector.load %arg9[%c0_33, %c0_34] : memref<1x8xf32, #tpu.memory_space<vmem>>, vector<1x8xf32>
      tpu.vector_store %arg9[%c0_33, %c0_34], %69 {strides = array<i32>} : memref<1x8xf32, #tpu.memory_space<vmem>>, vector<1x8xf32>,
      %c0_35 = arith.constant 0 : index
      %c0_36 = arith.constant 0 : index
      %71 = vector.load %arg10[%c0_35, %c0_36] : memref<1x8xf32, #tpu.memory_space<vmem>>, vector<1x8xf32>
      %cst_37 = arith.constant -9.99999986E+14 : f32
      %72 = vector.broadcast %cst_37 : f32 to vector<8x8xf32>
      %73 = arith.select %56, %7, %72 : vector<8x8xi1>, vector<8x8xf32>
      %cst_38 = arith.constant dense<0xFF800000> : vector<8xf32>
      %74 = vector.multi_reduction <maximumf>, %73, %cst_38 [0] : vector<8x8xf32> to vector<8xf32>
      %75 = vector.shape_cast %74 : vector<8xf32> to vector<1x8xf32>
      %76 = arith.maximumf %71, %75 : vector<1x8xf32>
      %c0_39 = arith.constant 0 : index
      %c0_40 = arith.constant 0 : index
      %77 = vector.load %arg10[%c0_39, %c0_40] : memref<1x8xf32, #tpu.memory_space<vmem>>, vector<1x8xf32>
      tpu.vector_store %arg10[%c0_39, %c0_40], %76 {strides = array<i32>} : memref<1x8xf32, #tpu.memory_space<vmem>>, vector<1x8xf32>,
    } else {
    }
    %c0_i32_19 = arith.constant 0 : i32
    %41 = arith.cmpi eq, %arg1, %c0_i32_19 : i32
    %42 = arith.extui %41 : i1 to i32
    %c0_i32_20 = arith.constant 0 : i32
    %43 = arith.cmpi ne, %42, %c0_i32_20 : i32
    scf.if %43 {
      %c0_21 = arith.constant 0 : index
      %c0_22 = arith.constant 0 : index
      %44 = vector.load %arg8[%c0_21, %c0_22] : memref<1x8xf32, #tpu.memory_space<vmem>>, vector<1x8xf32>
      %c0_23 = arith.constant 0 : index
      %c0_24 = arith.constant 0 : index
      %45 = vector.load %arg6[%c0_23, %c0_24] : memref<1x8xf32, #tpu.memory_space<vmem>>, vector<1x8xf32>
      tpu.vector_store %arg6[%c0_23, %c0_24], %44 {strides = array<i32>} : memref<1x8xf32, #tpu.memory_space<vmem>>, vector<1x8xf32>,
      %c0_25 = arith.constant 0 : index
      %c0_26 = arith.constant 0 : index
      %46 = vector.load %arg9[%c0_25, %c0_26] : memref<1x8xf32, #tpu.memory_space<vmem>>, vector<1x8xf32>
      %c0_27 = arith.constant 0 : index
      %c0_28 = arith.constant 0 : index
      %47 = vector.load %arg10[%c0_27, %c0_28] : memref<1x8xf32, #tpu.memory_space<vmem>>, vector<1x8xf32>
      %48 = arith.cmpf ogt, %46, %47 : vector<1x8xf32>
      %49 = arith.extui %48 : vector<1x8xi1> to vector<1x8xi32>
      %50 = arith.sitofp %49 : vector<1x8xi32> to vector<1x8xf32>
      %c0_29 = arith.constant 0 : index
      %c0_30 = arith.constant 0 : index
      %51 = vector.load %arg7[%c0_29, %c0_30] : memref<1x8xf32, #tpu.memory_space<vmem>>, vector<1x8xf32>
      tpu.vector_store %arg7[%c0_29, %c0_30], %50 {strides = array<i32>} : memref<1x8xf32, #tpu.memory_space<vmem>>, vector<1x8xf32>,
    } else {
    }
    return
  }
  func.func @transform_0(%arg0: i32, %arg1: i32) -> (i32, i32) {
    %c0_i32 = arith.constant 0 : i32
    %c0_i32_0 = arith.constant 0 : i32
    return %arg0, %c0_i32 : i32, i32
  }
  func.func @transform_1(%arg0: i32, %arg1: i32) -> (i32, i32) {
    %c0_i32 = arith.constant 0 : i32
    %c0_i32_0 = arith.constant 0 : i32
    return %arg1, %c0_i32 : i32, i32
  }
  func.func @transform_2(%arg0: i32, %arg1: i32) -> (i32, i32) {
    %c0_i32 = arith.constant 0 : i32
    %c0_i32_0 = arith.constant 0 : i32
    return %c0_i32, %arg0 : i32, i32
  }
  func.func @transform_3(%arg0: i32, %arg1: i32) -> (i32, i32) {
    %c0_i32 = arith.constant 0 : i32
    %c0_i32_0 = arith.constant 0 : i32
    return %arg1, %c0_i32 : i32, i32
  }
  func.func @transform_4(%arg0: i32, %arg1: i32) -> (i32, i32) {
    %c0_i32 = arith.constant 0 : i32
    %c0_i32_0 = arith.constant 0 : i32
    return %c0_i32, %arg0 : i32, i32
  }
  func.func @transform_5(%arg0: i32, %arg1: i32) -> (i32, i32) {
    %c0_i32 = arith.constant 0 : i32
    %c0_i32_0 = arith.constant 0 : i32
    return %c0_i32, %arg0 : i32, i32
  }
}

</mosaic_0001>

<llo_original>
// kernel: tpu_custom_call.1
$region0: #{tpu_custom_call.1}
  #allocation0 [shape = 'u32[]', space=smem, size = 0x4, offset = 0x4, fixed_abs, tag = 'smem constant byte address 0x4 - core index']
  #allocation1 [shape = 'u32[144,128]{1,0:T(1,128)}', space=vmem, size = 0x12000, scoped, tag = 'internal scratch']
  #allocation2 [shape = 'f32[1,8]{1,0:T(1,128)}', space=vmem, size = 0x200, scoped, tag = 'scratch operand']
  #allocation3 [shape = 'f32[1,8]{1,0:T(1,128)}', space=vmem, size = 0x200, scoped, tag = 'scratch operand']
  #allocation4 [shape = 'f32[1,8]{1,0:T(1,128)}', space=vmem, size = 0x200, scoped, tag = 'scratch operand']
  %s0 = inlined_call_operand.hbm [shape: bf16[8,1024], index: 0, kind: input, shape index: {}]
  %s1 = inlined_call_operand.hbm [shape: bf16[8,1024], index: 1, kind: input, shape index: {}]
  %s2 = inlined_call_operand.vmem [shape: s32[1,8], index: 2, kind: input, shape index: {}]
  %s3 = inlined_call_operand.vmem [shape: s32[8,1], index: 3, kind: input, shape index: {}]
  %s4 = inlined_call_operand.hbm [shape: f32[1,8], index: 4, kind: output, shape index: {0}]
  %s5 = inlined_call_operand.hbm [shape: f32[1,8], index: 5, kind: output, shape index: {1}]
  %6 = xla_tuple %s4, %s5
  %s7 = sld [smem:[#allocation0]]
  $region58: #{tpu_custom_call.1} parent=0
    _
  %s9 = ssub.s32 1, %s7
  %s10 = scalar_select 0, %s9, %s7
  $region1: #{tpu_custom_call.1} parent=0
    #allocation5 [shape = 'u8[16384]{0}', space=vmem, size = 0x4000, scoped, tag = 'input window, operand 0, single buffered']
    #allocation6 [shape = 's32[1]{0}', space=sflag, size = 0x4, scoped, tag = 'scoped memory for tpu_custom_call.1']
    #allocation7 [shape = 's32[1]{0}', space=sflag, size = 0x4, scoped, tag = 'scoped memory for tpu_custom_call.1']
    #allocation8 [shape = 'u8[16384]{0}', space=vmem, size = 0x4000, scoped, tag = 'input window, operand 1, single buffered']
    #allocation9 [shape = 's32[1]{0}', space=sflag, size = 0x4, scoped, tag = 'scoped memory for tpu_custom_call.1']
    #allocation10 [shape = 'u8[512]{0}', space=vmem, size = 0x400, scoped, tag = 'output window, operand 0, single buffered']
    #allocation11 [shape = 'u8[512]{0}', space=vmem, size = 0x400, scoped, tag = 'output window, operand 1, single buffered']
    #allocation12 [shape = 's32[1]{0}', space=sflag, size = 0x4, scoped, tag = 'scoped memory for tpu_custom_call.1']
    %11 = vsyncpa [#allocation6], 0
    %12 = vsyncpa [#allocation9], 0
    %13 = vsyncpa [#allocation7], 0
    %14 = vsyncpa [#allocation12], 0
    // Predicated region
    $region2: #{tpu_custom_call.1} parent=1 // pred_check
      _
    $region3: #{tpu_custom_call.1} parent=1 // pred_check_branch
      %16 = sbr.rel (0) target = $region5
    $region4: #{tpu_custom_call.1} parent=1 // pred_region
      %s18 = ssub.s32 512, 512
      %19 = vsyncadd [#allocation6], %s18
      %s21 = sshll.u32 [#allocation5], 4
      %s22 = int_to_ptr.vmem [resolvable:$true] %s21
      %24 = dma.hbm_to_vmem [thread:$0]  %s0, 512, %s22, [#allocation6]
    $region5: #{tpu_custom_call.1} parent=1 // pred_fallthru
      _
    // Predicated region
    $region6: #{tpu_custom_call.1} parent=1 // pred_check
      _
    $region7: #{tpu_custom_call.1} parent=1 // pred_check_branch
      %26 = sbr.rel (0) target = $region9
    $region8: #{tpu_custom_call.1} parent=1 // pred_region
      %s28 = ssub.s32 512, 512
      %29 = vsyncadd [#allocation9], %s28
      %s31 = sshll.u32 [#allocation8], 4
      %s32 = int_to_ptr.vmem [resolvable:$true] %s31
      %34 = dma.hbm_to_vmem [thread:$0]  %s1, 512, %s32, [#allocation9]
    $region9: #{tpu_custom_call.1} parent=1 // pred_fallthru
      _
    // Predicated region
    $region10: #{tpu_custom_call.1} parent=1 // pred_check
      _
    $region11: #{tpu_custom_call.1} parent=1 // pred_check_branch
      %36 = sbr.rel (0) target = $region13
    $region12: #{tpu_custom_call.1} parent=1 // pred_region
      _
    $region13: #{tpu_custom_call.1} parent=1 // pred_fallthru
      _
    // Predicated region
    $region14: #{tpu_custom_call.1} parent=1 // pred_check
      _
    $region15: #{tpu_custom_call.1} parent=1 // pred_check_branch
      %38 = sbr.rel (0) target = $region17
    $region16: #{tpu_custom_call.1} parent=1 // pred_region
      _
    $region17: #{tpu_custom_call.1} parent=1 // pred_fallthru
      _
    // Predicated region
    $region18: #{tpu_custom_call.1} parent=1 // pred_check
      _
    $region19: #{tpu_custom_call.1} parent=1 // pred_check_branch
      %40 = sbr.rel (0) target = $region21
    $region20: #{tpu_custom_call.1} parent=1 // pred_region
      %41 = dma.done [#allocation6], 512
    $region21: #{tpu_custom_call.1} parent=1 // pred_fallthru
      _
    // Predicated region
    $region22: #{tpu_custom_call.1} parent=1 // pred_check
      _
    $region23: #{tpu_custom_call.1} parent=1 // pred_check_branch
      %43 = sbr.rel (0) target = $region25
    $region24: #{tpu_custom_call.1} parent=1 // pred_region
      %44 = dma.done [#allocation9], 512
    $region25: #{tpu_custom_call.1} parent=1 // pred_fallthru
      _
    %p46 = scmp.eq.s32.totalorder 0, 0
    // Predicated region
    $region26: #{tpu_custom_call.1} parent=1 // pred_check
      %p47 = pneg %p46
    $region27: #{tpu_custom_call.1} parent=1 // pred_check_branch
      %49 = sbr.rel (%p47) target = $region29
    $region28: #{tpu_custom_call.1} parent=1 // pred_region
      %vm50 = vcmask 57344
      %51 = vst.msk [vmem:[#allocation2] sm:$0x1] %vm50, 0.0
      %52 = vst.msk [vmem:[#allocation3] sm:$0x1] %vm50, 1e+15
      %53 = vst.msk [vmem:[#allocation4] sm:$0x1] %vm50, -1e+15
    $region29: #{tpu_custom_call.1} parent=1 // pred_fallthru
      _
    %v54 = vld [vmem:[#allocation8] sm:$0xff]
    %v55 = vld [vmem:[#allocation8 + $0x8] sm:$0xff]
    %v56 = vld [vmem:[#allocation8 + $0x10] sm:$0xff]
    %v57 = vld [vmem:[#allocation8 + $0x18] sm:$0xff]
    %v58 = vld [vmem:[#allocation5] sm:$0xff]
    %v59 = vld [vmem:[#allocation5 + $0x8] sm:$0xff]
    %v60 = vld [vmem:[#allocation5 + $0x10] sm:$0xff]
    %v61 = vld [vmem:[#allocation5 + $0x18] sm:$0xff]
    %v66 = vunpack.c.l.b16 %v54
    %v67 = vunpack.c.h.b16 %v54
    %v68 = vunpack.c.l.b16 %v55
    %v69 = vunpack.c.h.b16 %v55
    %v70 = vunpack.c.l.b16 %v56
    %v71 = vunpack.c.h.b16 %v56
    %v72 = vunpack.c.l.b16 %v57
    %v73 = vunpack.c.h.b16 %v57
    %v74 = vpack.c.b16 %v66, %v66
    %v75 = vpack.c.b16 %v67, %v67
    %v76 = vpack.c.b16 %v68, %v68
    %v77 = vpack.c.b16 %v69, %v69
    %v78 = vpack.c.b16 %v70, %v70
    %v79 = vpack.c.b16 %v71, %v71
    %v80 = vpack.c.b16 %v72, %v72
    %v81 = vpack.c.b16 %v73, %v73
    %v94 = vunpack.c.l.b16 %v58
    %v95 = vunpack.c.h.b16 %v58
    %v96 = vunpack.c.l.b16 %v59
    %v97 = vunpack.c.h.b16 %v59
    %v98 = vunpack.c.l.b16 %v60
    %v99 = vunpack.c.h.b16 %v60
    %v100 = vunpack.c.l.b16 %v61
    %v101 = vunpack.c.h.b16 %v61
    %v102 = vpack.c.b16 %v94, %v94
    %v103 = vpack.c.b16 %v95, %v95
    %v104 = vpack.c.b16 %v96, %v96
    %v105 = vpack.c.b16 %v97, %v97
    %v106 = vpack.c.b16 %v98, %v98
    %v107 = vpack.c.b16 %v99, %v99
    %v108 = vpack.c.b16 %v100, %v100
    %v109 = vpack.c.b16 %v101, %v101
    %118 = vmatprep.subr.bf16.mxu0 0
    %119 = vmatpush1.bf16.xpose.msra.mxu0 0
    %120 = vmatprep.subr.bf16.mxu0 0
    %121 = vmatpush1.bf16.xpose.msra.mxu0 0
    %122 = vmatprep.subr.bf16.mxu0 0
    %123 = vmatpush1.bf16.xpose.msra.mxu0 0
    %124 = vmatprep.subr.bf16.mxu0 0
    %125 = vmatpush1.bf16.xpose.msra.mxu0 0
    %126 = vmatprep.subr.bf16.mxu0 0
    %127 = vmatpush1.bf16.xpose.msra.mxu0 0
    %128 = vmatprep.subr.bf16.mxu0 0
    %129 = vmatpush1.bf16.xpose.msra.mxu0 0
    %130 = vmatprep.subr.bf16.mxu0 0
    %131 = vmatpush1.bf16.xpose.msra.mxu0 0
    %132 = vmatprep.subr.bf16.mxu0 %v103
    %133 = vmatpush1.bf16.xpose.msra.mxu0 %v102
    %134 = vmatprep.subr.bf16.mxu0 0
    %135 = vmatpush2.bf16.xpose.msra.mxu0 0
    %136 = vmatprep.subr.bf16.mxu0 0
    %137 = vmatpush2.bf16.xpose.msra.mxu0 0
    %138 = vmatprep.subr.bf16.mxu0 0
    %139 = vmatpush2.bf16.xpose.msra.mxu0 0
    %140 = vmatprep.subr.bf16.mxu0 0
    %141 = vmatpush2.bf16.xpose.msra.mxu0 0
    %142 = vmatprep.subr.bf16.mxu0 0
    %143 = vmatpush2.bf16.xpose.msra.mxu0 0
    %144 = vmatprep.subr.bf16.mxu0 0
    %145 = vmatpush2.bf16.xpose.msra.mxu0 0
    %146 = vmatprep.subr.bf16.mxu0 0
    %147 = vmatpush2.bf16.xpose.msra.mxu0 0
    %148 = vmatprep.subr.bf16.mxu0 0
    %149 = vmatpush2.bf16.xpose.msra.mxu0 0
    %150 = vmatprep.mubr.bf16.mxu0 %v75
    %151 = vmatmul.mubr.bf16.gmra.mxu0 %v74
    %v152 = vpop.f32.mrf.mxu0
    %v153 = vadd.f32 -5.0, %v152
    %v154 = vpop.f32.mrf.mxu0
    %v155 = vpop.f32.mrf.mxu0
    %v156 = vpop.f32.mrf.mxu0
    %157 = vdwg.mxu0
    %158 = vmatprep.subr.bf16.mxu0 0
    %159 = vmatpush1.bf16.xpose.msra.mxu0 0
    %160 = vmatprep.subr.bf16.mxu0 0
    %161 = vmatpush1.bf16.xpose.msra.mxu0 0
    %162 = vmatprep.subr.bf16.mxu0 0
    %163 = vmatpush1.bf16.xpose.msra.mxu0 0
    %164 = vmatprep.subr.bf16.mxu0 0
    %165 = vmatpush1.bf16.xpose.msra.mxu0 0
    %166 = vmatprep.subr.bf16.mxu0 0
    %167 = vmatpush1.bf16.xpose.msra.mxu0 0
    %168 = vmatprep.subr.bf16.mxu0 0
    %169 = vmatpush1.bf16.xpose.msra.mxu0 0
    %170 = vmatprep.subr.bf16.mxu0 0
    %171 = vmatpush1.bf16.xpose.msra.mxu0 0
    %172 = vmatprep.subr.bf16.mxu0 %v105
    %173 = vmatpush1.bf16.xpose.msra.mxu0 %v104
    %174 = vmatprep.subr.bf16.mxu0 0
    %175 = vmatpush2.bf16.xpose.msra.mxu0 0
    %176 = vmatprep.subr.bf16.mxu0 0
    %177 = vmatpush2.bf16.xpose.msra.mxu0 0
    %178 = vmatprep.subr.bf16.mxu0 0
    %179 = vmatpush2.bf16.xpose.msra.mxu0 0
    %180 = vmatprep.subr.bf16.mxu0 0
    %181 = vmatpush2.bf16.xpose.msra.mxu0 0
    %182 = vmatprep.subr.bf16.mxu0 0
    %183 = vmatpush2.bf16.xpose.msra.mxu0 0
    %184 = vmatprep.subr.bf16.mxu0 0
    %185 = vmatpush2.bf16.xpose.msra.mxu0 0
    %186 = vmatprep.subr.bf16.mxu0 0
    %187 = vmatpush2.bf16.xpose.msra.mxu0 0
    %188 = vmatprep.subr.bf16.mxu0 0
    %189 = vmatpush2.bf16.xpose.msra.mxu0 0
    %190 = vmatprep.mubr.bf16.mxu0 %v77
    %191 = vmatmul.mubr.bf16.gmra.mxu0 %v76
    %v192 = vpop.f32.mrf.mxu0
    %v193 = vadd.f32 %v153, %v192
    %v194 = vpop.f32.mrf.mxu0
    %v195 = vpop.f32.mrf.mxu0
    %v196 = vpop.f32.mrf.mxu0
    %197 = vdwg.mxu0
    %198 = vmatprep.subr.bf16.mxu0 0
    %199 = vmatpush1.bf16.xpose.msra.mxu0 0
    %200 = vmatprep.subr.bf16.mxu0 0
    %201 = vmatpush1.bf16.xpose.msra.mxu0 0
    %202 = vmatprep.subr.bf16.mxu0 0
    %203 = vmatpush1.bf16.xpose.msra.mxu0 0
    %204 = vmatprep.subr.bf16.mxu0 0
    %205 = vmatpush1.bf16.xpose.msra.mxu0 0
    %206 = vmatprep.subr.bf16.mxu0 0
    %207 = vmatpush1.bf16.xpose.msra.mxu0 0
    %208 = vmatprep.subr.bf16.mxu0 0
    %209 = vmatpush1.bf16.xpose.msra.mxu0 0
    %210 = vmatprep.subr.bf16.mxu0 0
    %211 = vmatpush1.bf16.xpose.msra.mxu0 0
    %212 = vmatprep.subr.bf16.mxu0 %v107
    %213 = vmatpush1.bf16.xpose.msra.mxu0 %v106
    %214 = vmatprep.subr.bf16.mxu0 0
    %215 = vmatpush2.bf16.xpose.msra.mxu0 0
    %216 = vmatprep.subr.bf16.mxu0 0
    %217 = vmatpush2.bf16.xpose.msra.mxu0 0
    %218 = vmatprep.subr.bf16.mxu0 0
    %219 = vmatpush2.bf16.xpose.msra.mxu0 0
    %220 = vmatprep.subr.bf16.mxu0 0
    %221 = vmatpush2.bf16.xpose.msra.mxu0 0
    %222 = vmatprep.subr.bf16.mxu0 0
    %223 = vmatpush2.bf16.xpose.msra.mxu0 0
    %224 = vmatprep.subr.bf16.mxu0 0
    %225 = vmatpush2.bf16.xpose.msra.mxu0 0
    %226 = vmatprep.subr.bf16.mxu0 0
    %227 = vmatpush2.bf16.xpose.msra.mxu0 0
    %228 = vmatprep.subr.bf16.mxu0 0
    %229 = vmatpush2.bf16.xpose.msra.mxu0 0
    %230 = vmatprep.mubr.bf16.mxu0 %v79
    %231 = vmatmul.mubr.bf16.gmra.mxu0 %v78
    %v232 = vpop.f32.mrf.mxu0
    %v233 = vadd.f32 %v193, %v232
    %v234 = vpop.f32.mrf.mxu0
    %v235 = vpop.f32.mrf.mxu0
    %v236 = vpop.f32.mrf.mxu0
    %237 = vdwg.mxu0
    %238 = vmatprep.subr.bf16.mxu0 0
    %239 = vmatpush1.bf16.xpose.msra.mxu0 0
    %240 = vmatprep.subr.bf16.mxu0 0
    %241 = vmatpush1.bf16.xpose.msra.mxu0 0
    %242 = vmatprep.subr.bf16.mxu0 0
    %243 = vmatpush1.bf16.xpose.msra.mxu0 0
    %244 = vmatprep.subr.bf16.mxu0 0
    %245 = vmatpush1.bf16.xpose.msra.mxu0 0
    %246 = vmatprep.subr.bf16.mxu0 0
    %247 = vmatpush1.bf16.xpose.msra.mxu0 0
    %248 = vmatprep.subr.bf16.mxu0 0
    %249 = vmatpush1.bf16.xpose.msra.mxu0 0
    %250 = vmatprep.subr.bf16.mxu0 0
    %251 = vmatpush1.bf16.xpose.msra.mxu0 0
    %252 = vmatprep.subr.bf16.mxu0 %v109
    %253 = vmatpush1.bf16.xpose.msra.mxu0 %v108
    %254 = vmatprep.subr.bf16.mxu0 0
    %255 = vmatpush2.bf16.xpose.msra.mxu0 0
    %256 = vmatprep.subr.bf16.mxu0 0
    %257 = vmatpush2.bf16.xpose.msra.mxu0 0
    %258 = vmatprep.subr.bf16.mxu0 0
    %259 = vmatpush2.bf16.xpose.msra.mxu0 0
    %260 = vmatprep.subr.bf16.mxu0 0
    %261 = vmatpush2.bf16.xpose.msra.mxu0 0
    %262 = vmatprep.subr.bf16.mxu0 0
    %263 = vmatpush2.bf16.xpose.msra.mxu0 0
    %264 = vmatprep.subr.bf16.mxu0 0
    %265 = vmatpush2.bf16.xpose.msra.mxu0 0
    %266 = vmatprep.subr.bf16.mxu0 0
    %267 = vmatpush2.bf16.xpose.msra.mxu0 0
    %268 = vmatprep.subr.bf16.mxu0 0
    %269 = vmatpush2.bf16.xpose.msra.mxu0 0
    %270 = vmatprep.mubr.bf16.mxu0 %v81
    %271 = vmatmul.mubr.bf16.gmra.mxu0 %v80
    %v272 = vpop.f32.mrf.mxu0
    %v273 = vadd.f32 %v233, %v272
    %v274 = vpop.f32.mrf.mxu0
    %v275 = vpop.f32.mrf.mxu0
    %v276 = vpop.f32.mrf.mxu0
    %277 = vdwg.mxu0
    %v278 = vld [vmem:[%s3] sm:$0xff]
    %v279 = vld [vmem:[%s2] sm:$0x1]
    %280 = vset.pattern.permute.xlu0 0
    %281 = vperm.xlu0 %280, %v278
    %v282 = vpop.permute.xlu0 %281
    %v283 = vlaneseq
    %v284 = vshrl.u32 %v283, 7
    %v285 = vsub.s32 0, %v284
    %v286 = vrot.slane %v279, %v285
    %vm287 = vcmp.eq.s32.totalorder %v282, %v286
    %v288 = vsel %vm287, 1, 0
    %v289 = vcvt.s32.f32 %v288
    %v290 = vmax.f32 %v273, 0.0
    %v291 = vmul.f32 %v273, %v289
    %v292 = vsub.f32 %v290, %v291
    %v293 = vand.u32 2147483647, %v273
    %v294 = vsub.f32 0.0, %v293
    %v295 = vmul.f32 %v294, 1.442695
    %v296 = vpow.pop %v295
    %v297 = vadd.f32 %v296, 1.0
    %v298 = vlog2.pop %v297
    %v299 = vmul.f32 %v298, 0.6931472
    %v300 = vmul.f32 -0.5, %v296
    %v301 = vadd.f32 %v300, 1.0
    %v302 = vmul.f32 %v301, %v296
    %v303 = vand.u32 2147483647, %v296
    %vm304 = vcmp.lt.f32.partialorder %v303, 0.0004427343
    %v305 = vsel %vm304, %v302, %v299
    %v306 = vadd.f32 %v292, %v305
    %s307 = smul.u32 0, 8
    %s308 = smul.u32 0, 8
    %s309 = sadd.s32 %s308, 8
    %p310 = scmp.le.s32.totalorder %s309, 8
    %s311 = sadd.s32 %s307, 8
    %p312 = scmp.lt.s32.totalorder %s308, %s311
    %p313 = scmp.lt.s32.totalorder %s307, %s309
    %p314 = pnand %p312, %p313
    %p315 = pneg %p314
    %p316 = pneg %p315
    %p317 = pnand %p310, %p316
    %p318 = pneg %p317
    // Predicated region
    $region30: #{tpu_custom_call.1} parent=1 // pred_check
      _
    $region31: #{tpu_custom_call.1} parent=1 // pred_check_branch
      %320 = sbr.rel (%p317) target = $region33
    $region32: #{tpu_custom_call.1} parent=1 // pred_region
      %v321 = vld [vmem:[#allocation2] sm:$0x1]
      %vm322 = vcmask 64512
      %v323 = vsel %vm322, %v306, 0.0
      %v324 = vrot.slane %v323, 4
      %v325 = vadd.f32 %v323, %v324
      %v326 = vrot.slane %v325, 2
      %v327 = vadd.f32 %v325, %v326
      %v328 = vrot.slane %v327, 1
      %v329 = vadd.f32 %v327, %v328
      %v330 = vadd.f32 %v321, %v329
      %vm331 = vcmask 57344
      %332 = vst.msk [vmem:[#allocation2] sm:$0x1] %vm331, %v330
      %v333 = vld [vmem:[#allocation3] sm:$0x1]
      %v334 = vsel %vm287, %v273, 1e+15
      %v335 = vsel %vm322, %v334, inf
      %v336 = vrot.slane %v335, 4
      %v337 = vmin.f32 %v335, %v336
      %v338 = vrot.slane %v337, 2
      %v339 = vmin.f32 %v337, %v338
      %v340 = vrot.slane %v339, 1
      %v341 = vmin.f32 %v339, %v340
      %v342 = vmin.f32 %v333, %v341
      %343 = vst.msk [vmem:[#allocation3] sm:$0x1] %vm331, %v342
      %v344 = vld [vmem:[#allocation4] sm:$0x1]
      %v345 = vsel %vm287, -1e+15, %v273
      %v346 = vsel %vm322, %v345, -inf
      %v347 = vrot.slane %v346, 4
      %v348 = vmax.f32 %v346, %v347
      %v349 = vrot.slane %v348, 2
      %v350 = vmax.f32 %v348, %v349
      %v351 = vrot.slane %v350, 1
      %v352 = vmax.f32 %v350, %v351
      %v353 = vmax.f32 %v344, %v352
      %354 = vst.msk [vmem:[#allocation4] sm:$0x1] %vm331, %v353
    $region33: #{tpu_custom_call.1} parent=1 // pred_fallthru
      _
    %p355 = pneg %p318
    // Predicated region
    $region34: #{tpu_custom_call.1} parent=1 // pred_check
      _
    $region35: #{tpu_custom_call.1} parent=1 // pred_check_branch
      %357 = sbr.rel (%p318) target = $region37
    $region36: #{tpu_custom_call.1} parent=1 // pred_region
      %v358 = vlaneseq
      %v359 = vshrl.u32 %v358, 7
      %v360 = vstv %s308
      %v361 = vadd.s32 %v360, %v359
      %v362 = vlaneseq
      %v363 = vand.u32 %v362, 127
      %v364 = vstv %s307
      %v365 = vadd.s32 %v364, %v363
      %vm366 = vcmp.lt.s32.totalorder %v361, 8
      %vm367 = vcmp.ne.s32.totalorder %v361, %v365
      %vm368 = vmand %vm287, %vm367
      %vm369 = vmand %vm368, %vm366
      %vm370 = vmxor %vm287, 1
      %vm371 = vmand %vm370, %vm366
      %v372 = vld [vmem:[#allocation2] sm:$0x1]
      %v373 = vsel %vm366, %v306, 0.0
      %vm374 = vcmask 64512
      %v375 = vsel %vm374, %v373, 0.0
      %v376 = vrot.slane %v375, 4
      %v377 = vadd.f32 %v375, %v376
      %v378 = vrot.slane %v377, 2
      %v379 = vadd.f32 %v377, %v378
      %v380 = vrot.slane %v379, 1
      %v381 = vadd.f32 %v379, %v380
      %v382 = vadd.f32 %v372, %v381
      %vm383 = vcmask 57344
      %384 = vst.msk [vmem:[#allocation2] sm:$0x1] %vm383, %v382
      %v385 = vld [vmem:[#allocation3] sm:$0x1]
      %v386 = vsel %vm369, %v273, 1e+15
      %v387 = vsel %vm374, %v386, inf
      %v388 = vrot.slane %v387, 4
      %v389 = vmin.f32 %v387, %v388
      %v390 = vrot.slane %v389, 2
      %v391 = vmin.f32 %v389, %v390
      %v392 = vrot.slane %v391, 1
      %v393 = vmin.f32 %v391, %v392
      %v394 = vmin.f32 %v385, %v393
      %395 = vst.msk [vmem:[#allocation3] sm:$0x1] %vm383, %v394
      %v396 = vld [vmem:[#allocation4] sm:$0x1]
      %v397 = vsel %vm371, %v273, -1e+15
      %v398 = vsel %vm374, %v397, -inf
      %v399 = vrot.slane %v398, 4
      %v400 = vmax.f32 %v398, %v399
      %v401 = vrot.slane %v400, 2
      %v402 = vmax.f32 %v400, %v401
      %v403 = vrot.slane %v402, 1
      %v404 = vmax.f32 %v402, %v403
      %v405 = vmax.f32 %v396, %v404
      %406 = vst.msk [vmem:[#allocation4] sm:$0x1] %vm383, %v405
    $region37: #{tpu_custom_call.1} parent=1 // pred_fallthru
      _
    // Predicated region
    $region38: #{tpu_custom_call.1} parent=1 // pred_check
      %p407 = pneg %p46
    $region39: #{tpu_custom_call.1} parent=1 // pred_check_branch
      %409 = sbr.rel (%p407) target = $region41
    $region40: #{tpu_custom_call.1} parent=1 // pred_region
      %v410 = vld [vmem:[#allocation2] sm:$0x1]
      %vm411 = vcmask 57344
      %412 = vst.msk [vmem:[#allocation10] sm:$0x1] %vm411, %v410
      %v413 = vld [vmem:[#allocation3] sm:$0x1]
      %v414 = vld [vmem:[#allocation4] sm:$0x1]
      %vm415 = vcmp.gt.f32.partialorder %v413, %v414
      %v416 = vsel %vm415, 1, 0
      %v417 = vcvt.s32.f32 %v416
      %418 = vst.msk [vmem:[#allocation11] sm:$0x1] %vm411, %v417
    $region41: #{tpu_custom_call.1} parent=1 // pred_fallthru
      _
    // Predicated region
    $region42: #{tpu_custom_call.1} parent=1 // pred_check
      _
    $region43: #{tpu_custom_call.1} parent=1 // pred_check_branch
      %420 = sbr.rel (0) target = $region45
    $region44: #{tpu_custom_call.1} parent=1 // pred_region
      %s422 = ssub.s32 16, 16
      %423 = vsyncadd [#allocation7], %s422
      %s425 = sshll.u32 [#allocation10], 4
      %s426 = int_to_ptr.vmem [resolvable:$true] %s425
      %428 = dma.vmem_to_hbm [thread:$0]  %s426, 16, %s4, [#allocation7]
    $region45: #{tpu_custom_call.1} parent=1 // pred_fallthru
      _
    // Predicated region
    $region46: #{tpu_custom_call.1} parent=1 // pred_check
      _
    $region47: #{tpu_custom_call.1} parent=1 // pred_check_branch
      %430 = sbr.rel (0) target = $region49
    $region48: #{tpu_custom_call.1} parent=1 // pred_region
      %s432 = ssub.s32 16, 16
      %433 = vsyncadd [#allocation12], %s432
      %s435 = sshll.u32 [#allocation11], 4
      %s436 = int_to_ptr.vmem [resolvable:$true] %s435
      %438 = dma.vmem_to_hbm [thread:$0]  %s436, 16, %s5, [#allocation12]
    $region49: #{tpu_custom_call.1} parent=1 // pred_fallthru
      _
    // Predicated region
    $region50: #{tpu_custom_call.1} parent=1 // pred_check
      _
    $region51: #{tpu_custom_call.1} parent=1 // pred_check_branch
      %440 = sbr.rel (0) target = $region53
    $region52: #{tpu_custom_call.1} parent=1 // pred_region
      %441 = dma.done [#allocation7], 16
    $region53: #{tpu_custom_call.1} parent=1 // pred_fallthru
      _
    // Predicated region
    $region54: #{tpu_custom_call.1} parent=1 // pred_check
      _
    $region55: #{tpu_custom_call.1} parent=1 // pred_check_branch
      %443 = sbr.rel (0) target = $region57
    $region56: #{tpu_custom_call.1} parent=1 // pred_region
      %444 = dma.done [#allocation12], 16
    $region57: #{tpu_custom_call.1} parent=1 // pred_fallthru
      _
    %445 = vsyncpa [#allocation6], 1
    %446 = vsyncpa [#allocation9], 1
    %447 = vsyncpa [#allocation7], 1
    %448 = vsyncpa [#allocation12], 1

</llo_original>
